<compile_context>
chip_gen: v7x
topology: tpu7x:2x2x1
jax: 0.10.0
libtpu: 0.0.40
codegen_flags: <defaults>
</compile_context>

<pallas_src>
import jax
import jax.numpy as jnp
from jax.experimental import pallas as pl
from jax.experimental.pallas import tpu as pltpu


# ---------------------------------------------------------------------------
# Parameter / buffer construction (plain JAX glue, deterministic)
# ---------------------------------------------------------------------------
def build_embedding_table(num_steps: int, dim: int) -> jnp.ndarray:
    """Equivalent of DiffusionEmbedding._build_embedding (dim = embedding_dim / 2)."""
    steps = jnp.arange(num_steps, dtype=jnp.float32)[:, None]          # (T, 1)
    freqs = 10.0 ** (jnp.arange(dim, dtype=jnp.float32) / (dim - 1))   # (dim,)
    table = steps * freqs[None, :]                                     # (T, dim)
    return jnp.concatenate([jnp.sin(table), jnp.cos(table)], axis=1)   # (T, 2*dim)


def init_linear(key, in_features: int, out_features: int):
    """Deterministic init mirroring nn.Linear default (uniform +/- 1/sqrt(fan_in)).
    Weight is returned already transposed to (in, out)."""
    k_w, k_b = jax.random.split(key)
    bound = 1.0 / jnp.sqrt(jnp.float32(in_features))
    w = jax.random.uniform(k_w, (in_features, out_features), jnp.float32, -bound, bound)
    b = jax.random.uniform(k_b, (1, out_features), jnp.float32, -bound, bound)
    return w, b


def _silu(x):
    return x * jax.nn.sigmoid(x)


def _round_up(x: int, m: int) -> int:
    return (x + m - 1) // m * m


# ---------------------------------------------------------------------------
# Pallas kernel: (TB, E) rows -> matmul -> SiLU -> matmul -> SiLU  (all f32)
# ---------------------------------------------------------------------------
def diffusion_embedding_kernel(x_ref,              # (TB, E) f32 gathered embedding rows
                               w1_ref, b1_ref,     # (E, P) f32, (1, P) f32
                               w2_ref, b2_ref,     # (P, P) f32, (1, P) f32
                               out_ref):           # (TB, P) f32
    x = x_ref[...]                                                      # (TB, E)
    h = jnp.dot(x, w1_ref[...], preferred_element_type=jnp.float32) + b1_ref[...]
    h = _silu(h)                                                        # f32 SiLU (EUP)
    y = jnp.dot(h, w2_ref[...], preferred_element_type=jnp.float32) + b2_ref[...]
    out_ref[...] = _silu(y).astype(out_ref.dtype)


@jax.jit
def diffusion_embedding_forward(diffusion_steps, embedding, w1, b1, w2, b2):
    """Batched forward: diffusion_steps is int scalar or (B,) int array -> (B, P) f32."""
    steps = jnp.atleast_1d(jnp.asarray(diffusion_steps, dtype=jnp.int32))
    num_steps, e_dim = embedding.shape
    p_dim = w1.shape[1]
    batch = steps.shape[0]

    # Gather in the wrapper (one fused XLA gather), clamp for safety.
    steps = jnp.clip(steps, 0, num_steps - 1)
    x = jnp.take(embedding, steps, axis=0)                              # (B, E) f32

    # Batch tile: multiple of 8 sublanes, capped at 256 (fills v6e/v7x MXU rows).
    tb = min(_round_up(batch, 8), 256)
    padded = _round_up(batch, tb)
    if padded != batch:
        x = jnp.pad(x, ((0, padded - batch), (0, 0)))
    grid_b = padded // tb

    # Advisory cost hint for XLA's scheduler (this call is overhead-dominated).
    flops = 2 * padded * p_dim * (e_dim + p_dim) + 6 * padded * p_dim
    transcendentals = 2 * padded * p_dim
    bytes_accessed = 4 * (padded * e_dim + e_dim * p_dim + p_dim * p_dim
                          + 2 * p_dim + padded * p_dim)

    out = pl.pallas_call(
        diffusion_embedding_kernel,
        out_shape=jax.ShapeDtypeStruct((padded, p_dim), jnp.float32),
        grid_spec=pltpu.PrefetchScalarGridSpec(
            num_scalar_prefetch=0,
            grid=(grid_b,),
            in_specs=[
                # Activation rows: one (TB, E) tile per grid step.
                pl.BlockSpec((tb, e_dim), lambda i: (i, 0)),
                # Weights / biases: constant block index -> DMA'd once, VMEM-resident.
                pl.BlockSpec((e_dim, p_dim), lambda i: (0, 0)),
                pl.BlockSpec((1, p_dim), lambda i: (0, 0)),
                pl.BlockSpec((p_dim, p_dim), lambda i: (0, 0)),
                pl.BlockSpec((1, p_dim), lambda i: (0, 0)),
            ],
            out_specs=pl.BlockSpec((tb, p_dim), lambda i: (i, 0)),
        ),
        compiler_params=pltpu.CompilerParams(
            # Only let megacore split the batch when there is >1 tile of work.
            dimension_semantics=(("parallel",) if grid_b > 1 else ("arbitrary",))),
        cost_estimate=pl.CostEstimate(
            flops=flops,
            transcendentals=transcendentals,
            bytes_accessed=bytes_accessed),
    )(x, w1, b1, w2, b2)
    return out[:batch]


def diffusion_embedding_forward_single(diffusion_step, embedding, w1, b1, w2, b2):
    """Matches the PyTorch module's forward(int) -> 1-D tensor semantics."""
    return diffusion_embedding_forward(
        jnp.asarray([diffusion_step], dtype=jnp.int32),
        embedding, w1, b1, w2, b2)[0]


# ---------------------------------------------------------------------------
# Reference (pure JAX) for correctness checks
# ---------------------------------------------------------------------------
def reference_forward(step, embedding, w1, b1, w2, b2):
    x = embedding[step]
    h = _silu(x @ w1 + b1[0])
    return _silu(h @ w2 + b2[0])


if __name__ == "__main__":
    num_steps = 50
    embedding_dim = 128
    projection_dim = 128     # defaults to embedding_dim in the module

    # Buffers / parameters (deterministic).
    embedding = build_embedding_table(num_steps, embedding_dim // 2)    # (50, 128) f32
    key = jax.random.PRNGKey(0)
    k1, k2 = jax.random.split(key)
    w1, b1 = init_linear(k1, embedding_dim, projection_dim)
    w2, b2 = init_linear(k2, projection_dim, projection_dim)

    # ---- batched path ----
    steps = jnp.array([7, 0, 49, 13, 25, 3, 42, 11], dtype=jnp.int32)   # (B=8,)
    out_batched = jax.block_until_ready(
        diffusion_embedding_forward(steps, embedding, w1, b1, w2, b2))
    assert out_batched.shape == (steps.shape[0], projection_dim)

    for r, s in enumerate(list(steps)):
        ref = reference_forward(int(s), embedding, w1, b1, w2, b2)
        assert jnp.allclose(out_batched[r], ref, atol=1e-2, rtol=1e-2), \
            f"row {r}: mismatch vs f32 reference"

    # ---- single-step path (module's forward(int) semantics) ----
    out_single = jax.block_until_ready(
        diffusion_embedding_forward_single(7, embedding, w1, b1, w2, b2))
    assert out_single.shape == (projection_dim,)
    assert jnp.allclose(out_single, out_batched[0], atol=1e-5, rtol=1e-5)

    print("KERNEL_OK")
</pallas_src>

<mosaic_0001>
module attributes {stable_mosaic.version = 11 : i64} {
  func.func @diffusion_embedding_kernel(%arg0: i32, %arg1: memref<8x128xf32, #tpu.memory_space<vmem>>, %arg2: memref<128x128xf32, #tpu.memory_space<vmem>>, %arg3: memref<1x128xf32, #tpu.memory_space<vmem>>, %arg4: memref<128x128xf32, #tpu.memory_space<vmem>>, %arg5: memref<1x128xf32, #tpu.memory_space<vmem>>, %arg6: memref<8x128xf32, #tpu.memory_space<vmem>>) attributes {dimension_semantics = [#tpu.dimension_semantics<arbitrary>], iteration_bounds = array<i64: 1>, scalar_prefetch = 0 : i64, scratch_operands = 0 : i64, tpu.core_type = #tpu.core_type<tc>, window_params = [{transform_indices = @transform_0, window_bounds = array<i64: 8, 128>}, {pipeline_mode = #tpu.pipeline_mode<synchronous>, transform_indices = @transform_1, window_bounds = array<i64: 128, 128>}, {pipeline_mode = #tpu.pipeline_mode<synchronous>, transform_indices = @transform_2, window_bounds = array<i64: 1, 128>}, {pipeline_mode = #tpu.pipeline_mode<synchronous>, transform_indices = @transform_3, window_bounds = array<i64: 128, 128>}, {pipeline_mode = #tpu.pipeline_mode<synchronous>, transform_indices = @transform_4, window_bounds = array<i64: 1, 128>}, {transform_indices = @transform_5, window_bounds = array<i64: 8, 128>}]} {
    %c0 = arith.constant 0 : index
    %c0_0 = arith.constant 0 : index
    %0 = vector.load %arg1[%c0, %c0_0] : memref<8x128xf32, #tpu.memory_space<vmem>>, vector<8x128xf32>
    %c0_1 = arith.constant 0 : index
    %c0_2 = arith.constant 0 : index
    %1 = vector.load %arg2[%c0_1, %c0_2] : memref<128x128xf32, #tpu.memory_space<vmem>>, vector<128x128xf32>
    %cst = arith.constant dense<0.000000e+00> : vector<8x128xf32>
    %2 = tpu.matmul %0, %1, %cst {dimension_numbers = #tpu.dot_dimension_numbers<[1], [0], [0], [1], [0, 0, 1, 1], [], []>} : vector<8x128xf32>, vector<128x128xf32>, vector<8x128xf32> -> vector<8x128xf32>
    %c0_3 = arith.constant 0 : index
    %c0_4 = arith.constant 0 : index
    %3 = vector.load %arg3[%c0_3, %c0_4] : memref<1x128xf32, #tpu.memory_space<vmem>>, vector<1x128xf32>
    %4 = vector.broadcast %3 : vector<1x128xf32> to vector<8x128xf32>
    %5 = arith.addf %2, %4 : vector<8x128xf32>
    %6 = arith.negf %5 : vector<8x128xf32>
    %7 = math.exp %6 : vector<8x128xf32>
    %cst_5 = arith.constant 1.000000e+00 : f32
    %8 = vector.broadcast %cst_5 : f32 to vector<8x128xf32>
    %9 = arith.addf %8, %7 : vector<8x128xf32>
    %10 = arith.divf %8, %9 : vector<8x128xf32>
    %11 = arith.mulf %5, %10 : vector<8x128xf32>
    %c0_6 = arith.constant 0 : index
    %c0_7 = arith.constant 0 : index
    %12 = vector.load %arg4[%c0_6, %c0_7] : memref<128x128xf32, #tpu.memory_space<vmem>>, vector<128x128xf32>
    %cst_8 = arith.constant dense<0.000000e+00> : vector<8x128xf32>
    %13 = tpu.matmul %11, %12, %cst_8 {dimension_numbers = #tpu.dot_dimension_numbers<[1], [0], [0], [1], [0, 0, 1, 1], [], []>} : vector<8x128xf32>, vector<128x128xf32>, vector<8x128xf32> -> vector<8x128xf32>
    %c0_9 = arith.constant 0 : index
    %c0_10 = arith.constant 0 : index
    %14 = vector.load %arg5[%c0_9, %c0_10] : memref<1x128xf32, #tpu.memory_space<vmem>>, vector<1x128xf32>
    %15 = vector.broadcast %14 : vector<1x128xf32> to vector<8x128xf32>
    %16 = arith.addf %13, %15 : vector<8x128xf32>
    %17 = arith.negf %16 : vector<8x128xf32>
    %18 = math.exp %17 : vector<8x128xf32>
    %cst_11 = arith.constant 1.000000e+00 : f32
    %19 = vector.broadcast %cst_11 : f32 to vector<8x128xf32>
    %20 = arith.addf %19, %18 : vector<8x128xf32>
    %21 = arith.divf %19, %20 : vector<8x128xf32>
    %22 = arith.mulf %16, %21 : vector<8x128xf32>
    %c0_12 = arith.constant 0 : index
    %c0_13 = arith.constant 0 : index
    %23 = vector.load %arg6[%c0_12, %c0_13] : memref<8x128xf32, #tpu.memory_space<vmem>>, vector<8x128xf32>
    tpu.vector_store %arg6[%c0_12, %c0_13], %22 {strides = array<i32>} : memref<8x128xf32, #tpu.memory_space<vmem>>, vector<8x128xf32>,
    return
  }
  func.func @transform_0(%arg0: i32) -> (i32, i32) {
    %c0_i32 = arith.constant 0 : i32
    %c0_i32_0 = arith.constant 0 : i32
    return %arg0, %c0_i32 : i32, i32
  }
  func.func @transform_1(%arg0: i32) -> (i32, i32) {
    %c0_i32 = arith.constant 0 : i32
    %c0_i32_0 = arith.constant 0 : i32
    %c0_i32_1 = arith.constant 0 : i32
    return %c0_i32, %c0_i32_0 : i32, i32
  }
  func.func @transform_2(%arg0: i32) -> (i32, i32) {
    %c0_i32 = arith.constant 0 : i32
    %c0_i32_0 = arith.constant 0 : i32
    %c0_i32_1 = arith.constant 0 : i32
    return %c0_i32, %c0_i32_0 : i32, i32
  }
  func.func @transform_3(%arg0: i32) -> (i32, i32) {
    %c0_i32 = arith.constant 0 : i32
    %c0_i32_0 = arith.constant 0 : i32
    %c0_i32_1 = arith.constant 0 : i32
    return %c0_i32, %c0_i32_0 : i32, i32
  }
  func.func @transform_4(%arg0: i32) -> (i32, i32) {
    %c0_i32 = arith.constant 0 : i32
    %c0_i32_0 = arith.constant 0 : i32
    %c0_i32_1 = arith.constant 0 : i32
    return %c0_i32, %c0_i32_0 : i32, i32
  }
  func.func @transform_5(%arg0: i32) -> (i32, i32) {
    %c0_i32 = arith.constant 0 : i32
    %c0_i32_0 = arith.constant 0 : i32
    return %arg0, %c0_i32 : i32, i32
  }
}

</mosaic_0001>

<llo_original>
// kernel: diffusion_embedding_forward.1
$region0: #{diffusion_embedding_forward.1}
  #allocation0 [shape = 'u32[]', space=smem, size = 0x4, offset = 0x4, fixed_abs, tag = 'smem constant byte address 0x4 - core index']
  #allocation1 [shape = 'u32[144,128]{1,0:T(1,128)}', space=vmem, size = 0x12000, scoped, tag = 'internal scratch']
  %s0 = inlined_call_operand.vmem [shape: f32[8,128], index: 0, kind: input, shape index: {}]
  %s1 = inlined_call_operand.hbm [shape: f32[128,128], index: 1, kind: input, shape index: {}]
  %s2 = inlined_call_operand.vmem [shape: f32[1,128], index: 2, kind: input, shape index: {}]
  %s3 = inlined_call_operand.hbm [shape: f32[128,128], index: 3, kind: input, shape index: {}]
  %s4 = inlined_call_operand.vmem [shape: f32[1,128], index: 4, kind: input, shape index: {}]
  %s5 = inlined_call_operand.hbm [shape: f32[8,128], index: 5, kind: output, shape index: {}]
  %s6 = sld [smem:[#allocation0]]
  $region38: #{diffusion_embedding_forward.1} parent=0
    _
  %s8 = ssub.s32 1, %s6
  %s9 = scalar_select 0, %s8, %s6
  $region1: #{diffusion_embedding_forward.1} parent=0
    #allocation2 [shape = 'u8[65536]{0}', space=vmem, size = 0x10000, scoped, tag = 'input window, operand 1, single buffered']
    #allocation3 [shape = 's32[1]{0}', space=sflag, size = 0x4, scoped, tag = 'scoped memory for diffusion_embedding_forward.1']
    #allocation4 [shape = 's32[1]{0}', space=sflag, size = 0x4, scoped, tag = 'scoped memory for diffusion_embedding_forward.1']
    #allocation5 [shape = 'u8[65536]{0}', space=vmem, size = 0x10000, scoped, tag = 'input window, operand 3, single buffered']
    #allocation6 [shape = 's32[1]{0}', space=sflag, size = 0x4, scoped, tag = 'scoped memory for diffusion_embedding_forward.1']
    #allocation7 [shape = 'u8[4096]{0}', space=vmem, size = 0x1000, scoped, tag = 'output window, operand 0, single buffered']
    %10 = vsyncpa [#allocation3], 0
    %11 = vsyncpa [#allocation6], 0
    %12 = vsyncpa [#allocation4], 0
    // Predicated region
    $region2: #{diffusion_embedding_forward.1} parent=1 // pred_check
      _
    $region3: #{diffusion_embedding_forward.1} parent=1 // pred_check_branch
      %14 = sbr.rel (0) target = $region5
    $region4: #{diffusion_embedding_forward.1} parent=1 // pred_region
      _
    $region5: #{diffusion_embedding_forward.1} parent=1 // pred_fallthru
      _
    // Predicated region
    $region6: #{diffusion_embedding_forward.1} parent=1 // pred_check
      _
    $region7: #{diffusion_embedding_forward.1} parent=1 // pred_check_branch
      %16 = sbr.rel (0) target = $region9
    $region8: #{diffusion_embedding_forward.1} parent=1 // pred_region
      %s18 = ssub.s32 2048, 2048
      %19 = vsyncadd [#allocation3], %s18
      %s20 = sshll.u32 [#allocation2], 4
      %s21 = int_to_ptr.vmem [resolvable:$true] %s20
      %26 = dma.hbm_to_vmem [thread:$0]  %s1, 2048, %s21, [#allocation3], 128, 128, 8
    $region9: #{diffusion_embedding_forward.1} parent=1 // pred_fallthru
      _
    // Predicated region
    $region10: #{diffusion_embedding_forward.1} parent=1 // pred_check
      _
    $region11: #{diffusion_embedding_forward.1} parent=1 // pred_check_branch
      %28 = sbr.rel (0) target = $region13
    $region12: #{diffusion_embedding_forward.1} parent=1 // pred_region
      _
    $region13: #{diffusion_embedding_forward.1} parent=1 // pred_fallthru
      _
    // Predicated region
    $region14: #{diffusion_embedding_forward.1} parent=1 // pred_check
      _
    $region15: #{diffusion_embedding_forward.1} parent=1 // pred_check_branch
      %30 = sbr.rel (0) target = $region17
    $region16: #{diffusion_embedding_forward.1} parent=1 // pred_region
      %s32 = ssub.s32 2048, 2048
      %33 = vsyncadd [#allocation6], %s32
      %s34 = sshll.u32 [#allocation5], 4
      %s35 = int_to_ptr.vmem [resolvable:$true] %s34
      %40 = dma.hbm_to_vmem [thread:$0]  %s3, 2048, %s35, [#allocation6], 128, 128, 8
    $region17: #{diffusion_embedding_forward.1} parent=1 // pred_fallthru
      _
    // Predicated region
    $region18: #{diffusion_embedding_forward.1} parent=1 // pred_check
      _
    $region19: #{diffusion_embedding_forward.1} parent=1 // pred_check_branch
      %42 = sbr.rel (0) target = $region21
    $region20: #{diffusion_embedding_forward.1} parent=1 // pred_region
      _
    $region21: #{diffusion_embedding_forward.1} parent=1 // pred_fallthru
      _
    // Predicated region
    $region22: #{diffusion_embedding_forward.1} parent=1 // pred_check
      _
    $region23: #{diffusion_embedding_forward.1} parent=1 // pred_check_branch
      %44 = sbr.rel (0) target = $region25
    $region24: #{diffusion_embedding_forward.1} parent=1 // pred_region
      %45 = dma.done [#allocation3], 2048
    $region25: #{diffusion_embedding_forward.1} parent=1 // pred_fallthru
      _
    // Predicated region
    $region26: #{diffusion_embedding_forward.1} parent=1 // pred_check
      _
    $region27: #{diffusion_embedding_forward.1} parent=1 // pred_check_branch
      %47 = sbr.rel (0) target = $region29
    $region28: #{diffusion_embedding_forward.1} parent=1 // pred_region
      %48 = dma.done [#allocation6], 2048
    $region29: #{diffusion_embedding_forward.1} parent=1 // pred_fallthru
      _
    %v49 = vld [vmem:[%s0] sm:$0xff]
    %v50 = vld [vmem:[#allocation2] sm:$0xff]
    %v51 = vld [vmem:[#allocation2 + $0x8] sm:$0xff]
    %v52 = vld [vmem:[#allocation2 + $0x10] sm:$0xff]
    %v53 = vld [vmem:[#allocation2 + $0x18] sm:$0xff]
    %v54 = vld [vmem:[#allocation2 + $0x20] sm:$0xff]
    %v55 = vld [vmem:[#allocation2 + $0x28] sm:$0xff]
    %v56 = vld [vmem:[#allocation2 + $0x30] sm:$0xff]
    %v57 = vld [vmem:[#allocation2 + $0x38] sm:$0xff]
    %v58 = vld [vmem:[#allocation2 + $0x40] sm:$0xff]
    %v59 = vld [vmem:[#allocation2 + $0x48] sm:$0xff]
    %v60 = vld [vmem:[#allocation2 + $0x50] sm:$0xff]
    %v61 = vld [vmem:[#allocation2 + $0x58] sm:$0xff]
    %v62 = vld [vmem:[#allocation2 + $0x60] sm:$0xff]
    %v63 = vld [vmem:[#allocation2 + $0x68] sm:$0xff]
    %v64 = vld [vmem:[#allocation2 + $0x70] sm:$0xff]
    %v65 = vld [vmem:[#allocation2 + $0x78] sm:$0xff]
    %v66 = vld [vmem:[%s2] sm:$0x1]
    %v68 = vlaneseq
    %v69 = vshrl.u32 %v68, 7
    %v70 = vsub.s32 0, %v69
    %v71 = vrot.slane %v66, %v70
    %73 = vmatprep.subr.mxu0 0.0
    %74 = vmatpush1.msra.mxu0 %v50
    %75 = vmatprep.subr.mxu0 0.0
    %76 = vmatpush1.msra.mxu0 %v51
    %77 = vmatprep.subr.mxu0 0.0
    %78 = vmatpush1.msra.mxu0 %v52
    %79 = vmatprep.subr.mxu0 0.0
    %80 = vmatpush1.msra.mxu0 %v53
    %81 = vmatprep.subr.mxu0 0.0
    %82 = vmatpush1.msra.mxu0 %v54
    %83 = vmatprep.subr.mxu0 0.0
    %84 = vmatpush1.msra.mxu0 %v55
    %85 = vmatprep.subr.mxu0 0.0
    %86 = vmatpush1.msra.mxu0 %v56
    %87 = vmatprep.subr.mxu0 0.0
    %88 = vmatpush1.msra.mxu0 %v57
    %89 = vmatprep.subr.mxu0 0.0
    %90 = vmatpush1.msra.mxu0 %v58
    %91 = vmatprep.subr.mxu0 0.0
    %92 = vmatpush1.msra.mxu0 %v59
    %93 = vmatprep.subr.mxu0 0.0
    %94 = vmatpush1.msra.mxu0 %v60
    %95 = vmatprep.subr.mxu0 0.0
    %96 = vmatpush1.msra.mxu0 %v61
    %97 = vmatprep.subr.mxu0 0.0
    %98 = vmatpush1.msra.mxu0 %v62
    %99 = vmatprep.subr.mxu0 0.0
    %100 = vmatpush1.msra.mxu0 %v63
    %101 = vmatprep.subr.mxu0 0.0
    %102 = vmatpush1.msra.mxu0 %v64
    %103 = vmatprep.subr.mxu0 0.0
    %104 = vmatpush1.msra.mxu0 %v65
    %105 = vmatprep.subr.mxu0 0.0
    %106 = vmatpush1.msra.mxu0 0.0
    %107 = vmatprep.subr.mxu0 0.0
    %108 = vmatpush1.msra.mxu0 0.0
    %109 = vmatprep.subr.mxu0 0.0
    %110 = vmatpush1.msra.mxu0 0.0
    %111 = vmatprep.subr.mxu0 0.0
    %112 = vmatpush1.msra.mxu0 0.0
    %113 = vmatprep.subr.mxu0 0.0
    %114 = vmatpush1.msra.mxu0 0.0
    %115 = vmatprep.subr.mxu0 0.0
    %116 = vmatpush1.msra.mxu0 0.0
    %117 = vmatprep.subr.mxu0 0.0
    %118 = vmatpush1.msra.mxu0 0.0
    %119 = vmatprep.subr.mxu0 0.0
    %120 = vmatpush1.msra.mxu0 0.0
    %121 = vmatprep.subr.mxu0 0.0
    %122 = vmatpush1.msra.mxu0 0.0
    %123 = vmatprep.subr.mxu0 0.0
    %124 = vmatpush1.msra.mxu0 0.0
    %125 = vmatprep.subr.mxu0 0.0
    %126 = vmatpush1.msra.mxu0 0.0
    %127 = vmatprep.subr.mxu0 0.0
    %128 = vmatpush1.msra.mxu0 0.0
    %129 = vmatprep.subr.mxu0 0.0
    %130 = vmatpush1.msra.mxu0 0.0
    %131 = vmatprep.subr.mxu0 0.0
    %132 = vmatpush1.msra.mxu0 0.0
    %133 = vmatprep.subr.mxu0 0.0
    %134 = vmatpush1.msra.mxu0 0.0
    %135 = vmatprep.subr.mxu0 0.0
    %136 = vmatpush1.msra.mxu0 0.0
    %137 = vmatprep.mubr.f32.mxu0 0.0
    %138 = vmatmul.mubr.f32.gmra.mrb[0].mxu0 %v49
    %v139 = vpop.f32.mrb[0].mxu0
    %v140 = vadd.f32 %v71, %v139
    %v141 = vpop.f32.mrb[0].mxu0
    %142 = vdwg.mxu0
    %v143 = vxor.u32 %v140, 2147483648
    %v144 = vmul.f32 %v143, 1.442695
    %v145 = vpow.pop %v144
    %v146 = vadd.f32 %v145, 1.0
    %v147 = vrcp.pop %v146
    %v148 = vmul.f32 1.0, %v147
    %v149 = vmul.f32 %v140, %v148
    %v150 = vld [vmem:[#allocation5] sm:$0xff]
    %v151 = vld [vmem:[#allocation5 + $0x8] sm:$0xff]
    %v152 = vld [vmem:[#allocation5 + $0x10] sm:$0xff]
    %v153 = vld [vmem:[#allocation5 + $0x18] sm:$0xff]
    %v154 = vld [vmem:[#allocation5 + $0x20] sm:$0xff]
    %v155 = vld [vmem:[#allocation5 + $0x28] sm:$0xff]
    %v156 = vld [vmem:[#allocation5 + $0x30] sm:$0xff]
    %v157 = vld [vmem:[#allocation5 + $0x38] sm:$0xff]
    %v158 = vld [vmem:[#allocation5 + $0x40] sm:$0xff]
    %v159 = vld [vmem:[#allocation5 + $0x48] sm:$0xff]
    %v160 = vld [vmem:[#allocation5 + $0x50] sm:$0xff]
    %v161 = vld [vmem:[#allocation5 + $0x58] sm:$0xff]
    %v162 = vld [vmem:[#allocation5 + $0x60] sm:$0xff]
    %v163 = vld [vmem:[#allocation5 + $0x68] sm:$0xff]
    %v164 = vld [vmem:[#allocation5 + $0x70] sm:$0xff]
    %v165 = vld [vmem:[#allocation5 + $0x78] sm:$0xff]
    %v166 = vld [vmem:[%s4] sm:$0x1]
    %v168 = vlaneseq
    %v169 = vshrl.u32 %v168, 7
    %v170 = vsub.s32 0, %v169
    %v171 = vrot.slane %v166, %v170
    %173 = vmatprep.subr.mxu0 0.0
    %174 = vmatpush1.msra.mxu0 %v150
    %175 = vmatprep.subr.mxu0 0.0
    %176 = vmatpush1.msra.mxu0 %v151
    %177 = vmatprep.subr.mxu0 0.0
    %178 = vmatpush1.msra.mxu0 %v152
    %179 = vmatprep.subr.mxu0 0.0
    %180 = vmatpush1.msra.mxu0 %v153
    %181 = vmatprep.subr.mxu0 0.0
    %182 = vmatpush1.msra.mxu0 %v154
    %183 = vmatprep.subr.mxu0 0.0
    %184 = vmatpush1.msra.mxu0 %v155
    %185 = vmatprep.subr.mxu0 0.0
    %186 = vmatpush1.msra.mxu0 %v156
    %187 = vmatprep.subr.mxu0 0.0
    %188 = vmatpush1.msra.mxu0 %v157
    %189 = vmatprep.subr.mxu0 0.0
    %190 = vmatpush1.msra.mxu0 %v158
    %191 = vmatprep.subr.mxu0 0.0
    %192 = vmatpush1.msra.mxu0 %v159
    %193 = vmatprep.subr.mxu0 0.0
    %194 = vmatpush1.msra.mxu0 %v160
    %195 = vmatprep.subr.mxu0 0.0
    %196 = vmatpush1.msra.mxu0 %v161
    %197 = vmatprep.subr.mxu0 0.0
    %198 = vmatpush1.msra.mxu0 %v162
    %199 = vmatprep.subr.mxu0 0.0
    %200 = vmatpush1.msra.mxu0 %v163
    %201 = vmatprep.subr.mxu0 0.0
    %202 = vmatpush1.msra.mxu0 %v164
    %203 = vmatprep.subr.mxu0 0.0
    %204 = vmatpush1.msra.mxu0 %v165
    %205 = vmatprep.subr.mxu0 0.0
    %206 = vmatpush1.msra.mxu0 0.0
    %207 = vmatprep.subr.mxu0 0.0
    %208 = vmatpush1.msra.mxu0 0.0
    %209 = vmatprep.subr.mxu0 0.0
    %210 = vmatpush1.msra.mxu0 0.0
    %211 = vmatprep.subr.mxu0 0.0
    %212 = vmatpush1.msra.mxu0 0.0
    %213 = vmatprep.subr.mxu0 0.0
    %214 = vmatpush1.msra.mxu0 0.0
    %215 = vmatprep.subr.mxu0 0.0
    %216 = vmatpush1.msra.mxu0 0.0
    %217 = vmatprep.subr.mxu0 0.0
    %218 = vmatpush1.msra.mxu0 0.0
    %219 = vmatprep.subr.mxu0 0.0
    %220 = vmatpush1.msra.mxu0 0.0
    %221 = vmatprep.subr.mxu0 0.0
    %222 = vmatpush1.msra.mxu0 0.0
    %223 = vmatprep.subr.mxu0 0.0
    %224 = vmatpush1.msra.mxu0 0.0
    %225 = vmatprep.subr.mxu0 0.0
    %226 = vmatpush1.msra.mxu0 0.0
    %227 = vmatprep.subr.mxu0 0.0
    %228 = vmatpush1.msra.mxu0 0.0
    %229 = vmatprep.subr.mxu0 0.0
    %230 = vmatpush1.msra.mxu0 0.0
    %231 = vmatprep.subr.mxu0 0.0
    %232 = vmatpush1.msra.mxu0 0.0
    %233 = vmatprep.subr.mxu0 0.0
    %234 = vmatpush1.msra.mxu0 0.0
    %235 = vmatprep.subr.mxu0 0.0
    %236 = vmatpush1.msra.mxu0 0.0
    %237 = vmatprep.mubr.f32.mxu0 0.0
    %238 = vmatmul.mubr.f32.gmra.mrb[0].mxu0 %v149
    %v239 = vpop.f32.mrb[0].mxu0
    %v240 = vadd.f32 %v171, %v239
    %v241 = vpop.f32.mrb[0].mxu0
    %242 = vdwg.mxu0
    %v243 = vxor.u32 %v240, 2147483648
    %v244 = vmul.f32 %v243, 1.442695
    %v245 = vpow.pop %v244
    %v246 = vadd.f32 %v245, 1.0
    %v247 = vrcp.pop %v246
    %v248 = vmul.f32 1.0, %v247
    %v249 = vmul.f32 %v240, %v248
    %250 = vst [vmem:[#allocation7] sm:$0xff] %v249
    // Predicated region
    $region30: #{diffusion_embedding_forward.1} parent=1 // pred_check
      _
    $region31: #{diffusion_embedding_forward.1} parent=1 // pred_check_branch
      %252 = sbr.rel (0) target = $region33
    $region32: #{diffusion_embedding_forward.1} parent=1 // pred_region
      %s254 = ssub.s32 128, 128
      %255 = vsyncadd [#allocation4], %s254
      %s257 = sshll.u32 [#allocation7], 4
      %s258 = int_to_ptr.vmem [resolvable:$true] %s257
      %260 = dma.vmem_to_hbm [thread:$0]  %s258, 128, %s5, [#allocation4]
    $region33: #{diffusion_embedding_forward.1} parent=1 // pred_fallthru
      _
    // Predicated region
    $region34: #{diffusion_embedding_forward.1} parent=1 // pred_check
      _
    $region35: #{diffusion_embedding_forward.1} parent=1 // pred_check_branch
      %262 = sbr.rel (0) target = $region37
    $region36: #{diffusion_embedding_forward.1} parent=1 // pred_region
      %263 = dma.done [#allocation4], 128
    $region37: #{diffusion_embedding_forward.1} parent=1 // pred_fallthru
      _
    %264 = vsyncpa [#allocation3], 1
    %265 = vsyncpa [#allocation6], 1
    %266 = vsyncpa [#allocation4], 1

</llo_original>
